<compile_context>
chip_gen: v5e
topology: v5e:2x2
jax: 0.10.0
libtpu: 0.0.40
codegen_flags: <defaults>
</compile_context>

<pallas_src>
import functools

import jax
import jax.numpy as jnp
from jax.experimental import pallas as pl
from jax.experimental.pallas import tpu as pltpu

LANE = 128
SUBLANE = 8


def _round_up(x: int, m: int) -> int:
    return ((x + m - 1) // m) * m


def _default_min_steps() -> int:
    """>=2 grid steps on v7x (2 TensorCores/chip), 1 step elsewhere."""
    try:
        kind = jax.devices()[0].device_kind.lower()
        return 2 if "v7" in kind else 1
    except Exception:  # pragma: no cover - defensive
        return 1


# ----------------------------------------------------------------------------
# Kernel
# ----------------------------------------------------------------------------
def skill_critic_kernel(obs_ref,   # (TB, obs_dim)          f32 (cast to bf16 in-kernel)
                        w1_ref,    # (obs_dim, feature_dim) bf16
                        ln_ref,    # (8, feature_dim)       f32: rows [b1; gamma; beta; 0...]
                        w2_ref,    # (feature_dim, hidden)  bf16
                        b2_ref,    # (1, hidden)            f32
                        w3_ref,    # (hidden, out_pad)      bf16 (zero-padded lanes)
                        b3_ref,    # (1, out_pad)           f32
                        out_ref,   # (TB, out_pad)          f32 (lane-dense)
                        *, feature_dim: int):
    """Fused trunk + q_net forward for one batch tile (everything in VMEM)."""
    # --- trunk: Linear -> LayerNorm -> Tanh ----------------------------------
    # In-kernel VPU cast of obs to the MXU dtype (rides in idle VALU slots).
    h = jnp.dot(obs_ref[...].astype(w1_ref.dtype), w1_ref[...],
                preferred_element_type=jnp.float32)
    h = h + ln_ref[0:1, :]                                    # + b1

    # Single-pass LayerNorm statistics: mean = E[x], var = E[x^2] - E[x]^2.
    inv_d = jnp.float32(1.0 / feature_dim)
    mean = jnp.sum(h, axis=-1, keepdims=True) * inv_d
    msq = jnp.sum(h * h, axis=-1, keepdims=True) * inv_d
    var = jnp.maximum(msq - mean * mean, 0.0)                 # clamp: f32 cancellation guard
    inv_std = jax.lax.rsqrt(var + 1e-5)                       # PyTorch LayerNorm eps, EUP rsqrt
    h = (h - mean) * inv_std * ln_ref[1:2, :] + ln_ref[2:3, :]

    t = jnp.tanh(h)                                           # (TB, feature_dim) f32, EUP

    # --- q_net: Linear -> ReLU -> Linear (bf16 MXU operands, f32 accumulate) --
    z = jnp.dot(t.astype(w2_ref.dtype), w2_ref[...],
                preferred_element_type=jnp.float32) + b2_ref[...]
    z = jnp.maximum(z, 0.0)                                   # ReLU, (TB, hidden) f32

    q = jnp.dot(z.astype(w3_ref.dtype), w3_ref[...],
                preferred_element_type=jnp.float32) + b3_ref[...]
    out_ref[...] = q.astype(out_ref.dtype)                    # unmasked lane-dense vst


# ----------------------------------------------------------------------------
# One-time parameter preprocessing (hoisted out of the hot path)
# ----------------------------------------------------------------------------
def prepare_params(params, mxu_dtype=jnp.bfloat16):
    """Pack / pad / cast parameters once. Returns (dict_of_arrays, skill_dim)."""
    (w1, b1, ln_g, ln_b, w2, b2, w3, b3) = params
    feature_dim = w1.shape[1]
    hidden_dim, skill_dim = w3.shape

    # Lane-dense output: pad skill_dim up to a multiple of 128 (padded columns
    # produce exactly-zero Q values; sliced off in the wrapper).
    out_pad = _round_up(skill_dim, LANE)
    w3p = jnp.zeros((hidden_dim, out_pad), mxu_dtype).at[:, :skill_dim].set(
        w3.astype(mxu_dtype))
    b3p = jnp.zeros((1, out_pad), jnp.float32).at[:, :skill_dim].set(
        b3.astype(jnp.float32))

    # Pack tiny per-feature params into one full (8, feature_dim) sublane tile.
    ln_pack = jnp.zeros((SUBLANE, feature_dim), jnp.float32)
    ln_pack = (ln_pack.at[0:1, :].set(b1.astype(jnp.float32))
                      .at[1:2, :].set(ln_g.astype(jnp.float32))
                      .at[2:3, :].set(ln_b.astype(jnp.float32)))

    prepped = dict(
        w1=w1.astype(mxu_dtype),
        ln=ln_pack,
        w2=w2.astype(mxu_dtype),
        b2=b2.astype(jnp.float32),
        w3=w3p,
        b3=b3p,
    )
    return prepped, skill_dim


# ----------------------------------------------------------------------------
# Forward wrapper
# ----------------------------------------------------------------------------
def skill_critic_forward(obs, prepped, *, skill_dim: int,
                         block_b: int = 512, min_steps: int = 1,
                         out_dtype=jnp.float32):
    """Fused SkillCritic forward. `prepped` comes from prepare_params()."""
    w1, ln_pack, w2, b2, w3, b3 = (prepped["w1"], prepped["ln"], prepped["w2"],
                                   prepped["b2"], prepped["w3"], prepped["b3"])
    B, obs_dim = obs.shape
    feature_dim = w1.shape[1]
    hidden_dim = w2.shape[1]
    out_pad = w3.shape[1]

    obs_f = obs.astype(jnp.float32)

    # Batch tiling: minimum number of balanced, sublane-aligned tiles.
    rows = _round_up(B, SUBLANE)
    n_steps = max(min_steps, pl.cdiv(rows, block_b))
    n_steps = min(n_steps, max(1, rows // SUBLANE))           # don't over-split tiny batches
    tb = _round_up(pl.cdiv(rows, n_steps), SUBLANE)
    Bp = tb * n_steps
    if Bp != B:
        obs_f = jnp.pad(obs_f, ((0, Bp - B), (0, 0)))
    grid = (n_steps,)

    const2 = lambda i: (0, 0)   # weights/biases: same block every step (VMEM-resident)

    # Advisory cost estimate so XLA schedules/overlaps the custom call sensibly.
    flops = 2 * Bp * (obs_dim * feature_dim
                      + feature_dim * hidden_dim
                      + hidden_dim * out_pad)
    transcendentals = Bp * feature_dim + Bp                    # tanh + rsqrt
    bytes_accessed = (obs_f.size * 4 + Bp * out_pad * jnp.dtype(out_dtype).itemsize
                      + (w1.size + w2.size + w3.size) * 2
                      + (ln_pack.size + b2.size + b3.size) * 4)
    cost = pl.CostEstimate(flops=flops, transcendentals=transcendentals,
                           bytes_accessed=bytes_accessed)

    out = pl.pallas_call(
        functools.partial(skill_critic_kernel, feature_dim=feature_dim),
        out_shape=jax.ShapeDtypeStruct((Bp, out_pad), out_dtype),
        grid=grid,
        in_specs=[
            pl.BlockSpec((tb, obs_dim), lambda i: (i, 0)),    # obs: tiled over batch
            pl.BlockSpec(w1.shape, const2),
            pl.BlockSpec(ln_pack.shape, const2),
            pl.BlockSpec(w2.shape, const2),
            pl.BlockSpec(b2.shape, const2),
            pl.BlockSpec(w3.shape, const2),
            pl.BlockSpec(b3.shape, const2),
        ],
        out_specs=pl.BlockSpec((tb, out_pad), lambda i: (i, 0)),
        compiler_params=pltpu.CompilerParams(
            dimension_semantics=("parallel",),                # megacore shard on v7x
        ),
        cost_estimate=cost,
    )(obs_f, w1, ln_pack, w2, b2, w3, b3)

    return out[:B, :skill_dim]


# ----------------------------------------------------------------------------
# Init + reference
# ----------------------------------------------------------------------------
def init_params(key, obs_dim, skill_dim, feature_dim, hidden_dim):
    """Deterministic synthetic init (mimics small-scale weight_init scaling).

    Weights stored as (in_dim, out_dim) — transposed vs. torch.nn.Linear.
    Biases kept 2D (1, out_dim) for clean lane-major broadcasting.
    """
    k1, k2, k3 = jax.random.split(key, 3)
    w1 = jax.random.normal(k1, (obs_dim, feature_dim), jnp.float32) / jnp.sqrt(obs_dim)
    b1 = jnp.zeros((1, feature_dim), jnp.float32)
    ln_g = jnp.ones((1, feature_dim), jnp.float32)
    ln_b = jnp.zeros((1, feature_dim), jnp.float32)
    w2 = jax.random.normal(k2, (feature_dim, hidden_dim), jnp.float32) / jnp.sqrt(feature_dim)
    b2 = jnp.zeros((1, hidden_dim), jnp.float32)
    w3 = jax.random.normal(k3, (hidden_dim, skill_dim), jnp.float32) / jnp.sqrt(hidden_dim)
    b3 = jnp.zeros((1, skill_dim), jnp.float32)
    return (w1, b1, ln_g, ln_b, w2, b2, w3, b3)


def reference_forward(obs, params, mxu_dtype=jnp.float32):
    """Pure-JAX reference. mxu_dtype=bf16 mirrors the kernel's bf16-input /
    f32-accumulate matmuls for a tight tolerance check."""
    (w1, b1, ln_g, ln_b, w2, b2, w3, b3) = params
    dot = lambda a, w: jnp.dot(a.astype(mxu_dtype), w.astype(mxu_dtype),
                               preferred_element_type=jnp.float32)
    h = dot(obs, w1) + b1
    mean = jnp.mean(h, axis=-1, keepdims=True)
    var = jnp.mean((h - mean) ** 2, axis=-1, keepdims=True)
    h = (h - mean) * jax.lax.rsqrt(var + 1e-5) * ln_g + ln_b
    t = jnp.tanh(h)
    z = jnp.maximum(dot(t, w2) + b2, 0.0)
    return dot(z, w3) + b3


if __name__ == "__main__":
    # Small shapes consistent with SkillCritic(obs_dim, skill_dim, feature_dim, hidden_dim).
    # batch=200 is not a multiple of 8/128 to exercise padding; the tile logic
    # still collapses to a single balanced grid step (two on v7x).
    batch, obs_dim, skill_dim, feature_dim, hidden_dim = 200, 32, 16, 64, 128

    key = jax.random.PRNGKey(0)
    k_obs, k_params = jax.random.split(key)
    obs = jax.random.normal(k_obs, (batch, obs_dim), jnp.float32)
    params = init_params(k_params, obs_dim, skill_dim, feature_dim, hidden_dim)

    # One-time preprocessing (bf16 casts / padding / packing), then jit the hot path.
    prepped, skill_dim_out = prepare_params(params)
    min_steps = _default_min_steps()
    fwd = jax.jit(lambda o, p: skill_critic_forward(
        o, p, skill_dim=skill_dim_out, block_b=512, min_steps=min_steps))

    q = fwd(obs, prepped)
    q = jax.block_until_ready(q)
    assert q.shape == (batch, skill_dim)

    # Tight check vs. a reference that mirrors the kernel's bf16 MXU inputs.
    q_ref_bf16 = reference_forward(obs, params, mxu_dtype=jnp.bfloat16)
    assert jnp.allclose(q, q_ref_bf16, atol=5e-3, rtol=1e-2), \
        "mismatch vs. bf16-matched reference"

    # Sanity check vs. the pure-f32 reference (bf16 MXU inputs => small drift).
    q_ref_f32 = reference_forward(obs, params, mxu_dtype=jnp.float32)
    max_err = float(jnp.max(jnp.abs(q - q_ref_f32)))
    assert max_err < 1e-1, f"bf16 drift too large vs f32 reference: {max_err}"

    print("KERNEL_OK")
</pallas_src>

<mosaic_0001>
module attributes {stable_mosaic.version = 11 : i64} {
  func.func @skill_critic_kernel(%arg0: i32, %arg1: memref<200x32xf32, #tpu.memory_space<vmem>>, %arg2: memref<32x64xbf16, #tpu.memory_space<vmem>>, %arg3: memref<8x64xf32, #tpu.memory_space<vmem>>, %arg4: memref<64x128xbf16, #tpu.memory_space<vmem>>, %arg5: memref<1x128xf32, #tpu.memory_space<vmem>>, %arg6: memref<128x128xbf16, #tpu.memory_space<vmem>>, %arg7: memref<1x128xf32, #tpu.memory_space<vmem>>, %arg8: memref<200x128xf32, #tpu.memory_space<vmem>>) attributes {dimension_semantics = [#tpu.dimension_semantics<parallel>], iteration_bounds = array<i64: 1>, scalar_prefetch = 0 : i64, scratch_operands = 0 : i64, tpu.core_type = #tpu.core_type<tc>, window_params = [{transform_indices = @transform_0, window_bounds = array<i64: 200, 32>}, {pipeline_mode = #tpu.pipeline_mode<synchronous>, transform_indices = @transform_1, window_bounds = array<i64: 32, 64>}, {pipeline_mode = #tpu.pipeline_mode<synchronous>, transform_indices = @transform_2, window_bounds = array<i64: 8, 64>}, {pipeline_mode = #tpu.pipeline_mode<synchronous>, transform_indices = @transform_3, window_bounds = array<i64: 64, 128>}, {pipeline_mode = #tpu.pipeline_mode<synchronous>, transform_indices = @transform_4, window_bounds = array<i64: 1, 128>}, {pipeline_mode = #tpu.pipeline_mode<synchronous>, transform_indices = @transform_5, window_bounds = array<i64: 128, 128>}, {pipeline_mode = #tpu.pipeline_mode<synchronous>, transform_indices = @transform_6, window_bounds = array<i64: 1, 128>}, {transform_indices = @transform_7, window_bounds = array<i64: 200, 128>}]} {
    %c0 = arith.constant 0 : index
    %c0_0 = arith.constant 0 : index
    %0 = vector.load %arg1[%c0, %c0_0] : memref<200x32xf32, #tpu.memory_space<vmem>>, vector<200x32xf32>
    %1 = arith.truncf %0 : vector<200x32xf32> to vector<200x32xbf16>
    %c0_1 = arith.constant 0 : index
    %c0_2 = arith.constant 0 : index
    %2 = vector.load %arg2[%c0_1, %c0_2] : memref<32x64xbf16, #tpu.memory_space<vmem>>, vector<32x64xbf16>
    %cst = arith.constant dense<0.000000e+00> : vector<200x64xf32>
    %3 = tpu.matmul %1, %2, %cst {dimension_numbers = #tpu.dot_dimension_numbers<[1], [0], [0], [1], [0, 0, 1, 1], [], []>} : vector<200x32xbf16>, vector<32x64xbf16>, vector<200x64xf32> -> vector<200x64xf32>
    %c0_3 = arith.constant 0 : index
    %c0_4 = arith.constant 0 : index
    %4 = vector.load %arg3[%c0_3, %c0_4] : memref<8x64xf32, #tpu.memory_space<vmem>>, vector<1x64xf32>
    %5 = vector.broadcast %4 : vector<1x64xf32> to vector<200x64xf32>
    %6 = arith.addf %3, %5 : vector<200x64xf32>
    %cst_5 = arith.constant dense<0.000000e+00> : vector<200xf32>
    %7 = vector.multi_reduction <add>, %6, %cst_5 [1] : vector<200x64xf32> to vector<200xf32>
    %8 = vector.shape_cast %7 : vector<200xf32> to vector<200x1xf32>
    %cst_6 = arith.constant 1.562500e-02 : f32
    %9 = vector.broadcast %cst_6 : f32 to vector<200x1xf32>
    %10 = arith.mulf %8, %9 : vector<200x1xf32>
    %11 = arith.mulf %6, %6 : vector<200x64xf32>
    %cst_7 = arith.constant dense<0.000000e+00> : vector<200xf32>
    %12 = vector.multi_reduction <add>, %11, %cst_7 [1] : vector<200x64xf32> to vector<200xf32>
    %13 = vector.shape_cast %12 : vector<200xf32> to vector<200x1xf32>
    %cst_8 = arith.constant 1.562500e-02 : f32
    %14 = vector.broadcast %cst_8 : f32 to vector<200x1xf32>
    %15 = arith.mulf %13, %14 : vector<200x1xf32>
    %16 = arith.mulf %10, %10 : vector<200x1xf32>
    %17 = arith.subf %15, %16 : vector<200x1xf32>
    %cst_9 = arith.constant 0.000000e+00 : f32
    %18 = vector.broadcast %cst_9 : f32 to vector<200x1xf32>
    %19 = arith.maximumf %17, %18 : vector<200x1xf32>
    %cst_10 = arith.constant 9.99999974E-6 : f32
    %20 = vector.broadcast %cst_10 : f32 to vector<200x1xf32>
    %21 = arith.addf %19, %20 : vector<200x1xf32>
    %22 = math.rsqrt %21 : vector<200x1xf32>
    %23 = vector.broadcast %10 : vector<200x1xf32> to vector<200x64xf32>
    %24 = arith.subf %6, %23 : vector<200x64xf32>
    %25 = vector.broadcast %22 : vector<200x1xf32> to vector<200x64xf32>
    %26 = arith.mulf %24, %25 : vector<200x64xf32>
    %c1 = arith.constant 1 : index
    %c0_11 = arith.constant 0 : index
    %27 = vector.load %arg3[%c1, %c0_11] : memref<8x64xf32, #tpu.memory_space<vmem>>, vector<1x64xf32>
    %28 = vector.broadcast %27 : vector<1x64xf32> to vector<200x64xf32>
    %29 = arith.mulf %26, %28 : vector<200x64xf32>
    %c2 = arith.constant 2 : index
    %c0_12 = arith.constant 0 : index
    %30 = vector.load %arg3[%c2, %c0_12] : memref<8x64xf32, #tpu.memory_space<vmem>>, vector<1x64xf32>
    %31 = vector.broadcast %30 : vector<1x64xf32> to vector<200x64xf32>
    %32 = arith.addf %29, %31 : vector<200x64xf32>
    %33 = math.tanh %32 : vector<200x64xf32>
    %34 = arith.truncf %33 : vector<200x64xf32> to vector<200x64xbf16>
    %c0_13 = arith.constant 0 : index
    %c0_14 = arith.constant 0 : index
    %35 = vector.load %arg4[%c0_13, %c0_14] : memref<64x128xbf16, #tpu.memory_space<vmem>>, vector<64x128xbf16>
    %cst_15 = arith.constant dense<0.000000e+00> : vector<200x128xf32>
    %36 = tpu.matmul %34, %35, %cst_15 {dimension_numbers = #tpu.dot_dimension_numbers<[1], [0], [0], [1], [0, 0, 1, 1], [], []>} : vector<200x64xbf16>, vector<64x128xbf16>, vector<200x128xf32> -> vector<200x128xf32>
    %c0_16 = arith.constant 0 : index
    %c0_17 = arith.constant 0 : index
    %37 = vector.load %arg5[%c0_16, %c0_17] : memref<1x128xf32, #tpu.memory_space<vmem>>, vector<1x128xf32>
    %38 = vector.broadcast %37 : vector<1x128xf32> to vector<200x128xf32>
    %39 = arith.addf %36, %38 : vector<200x128xf32>
    %cst_18 = arith.constant 0.000000e+00 : f32
    %40 = vector.broadcast %cst_18 : f32 to vector<200x128xf32>
    %41 = arith.maximumf %39, %40 : vector<200x128xf32>
    %42 = arith.truncf %41 : vector<200x128xf32> to vector<200x128xbf16>
    %c0_19 = arith.constant 0 : index
    %c0_20 = arith.constant 0 : index
    %43 = vector.load %arg6[%c0_19, %c0_20] : memref<128x128xbf16, #tpu.memory_space<vmem>>, vector<128x128xbf16>
    %cst_21 = arith.constant dense<0.000000e+00> : vector<200x128xf32>
    %44 = tpu.matmul %42, %43, %cst_21 {dimension_numbers = #tpu.dot_dimension_numbers<[1], [0], [0], [1], [0, 0, 1, 1], [], []>} : vector<200x128xbf16>, vector<128x128xbf16>, vector<200x128xf32> -> vector<200x128xf32>
    %c0_22 = arith.constant 0 : index
    %c0_23 = arith.constant 0 : index
    %45 = vector.load %arg7[%c0_22, %c0_23] : memref<1x128xf32, #tpu.memory_space<vmem>>, vector<1x128xf32>
    %46 = vector.broadcast %45 : vector<1x128xf32> to vector<200x128xf32>
    %47 = arith.addf %44, %46 : vector<200x128xf32>
    %c0_24 = arith.constant 0 : index
    %c0_25 = arith.constant 0 : index
    %48 = vector.load %arg8[%c0_24, %c0_25] : memref<200x128xf32, #tpu.memory_space<vmem>>, vector<200x128xf32>
    tpu.vector_store %arg8[%c0_24, %c0_25], %47 {strides = array<i32>} : memref<200x128xf32, #tpu.memory_space<vmem>>, vector<200x128xf32>,
    return
  }
  func.func @transform_0(%arg0: i32) -> (i32, i32) {
    %c0_i32 = arith.constant 0 : i32
    %c0_i32_0 = arith.constant 0 : i32
    return %arg0, %c0_i32 : i32, i32
  }
  func.func @transform_1(%arg0: i32) -> (i32, i32) {
    %c0_i32 = arith.constant 0 : i32
    %c0_i32_0 = arith.constant 0 : i32
    %c0_i32_1 = arith.constant 0 : i32
    return %c0_i32, %c0_i32_0 : i32, i32
  }
  func.func @transform_2(%arg0: i32) -> (i32, i32) {
    %c0_i32 = arith.constant 0 : i32
    %c0_i32_0 = arith.constant 0 : i32
    %c0_i32_1 = arith.constant 0 : i32
    return %c0_i32, %c0_i32_0 : i32, i32
  }
  func.func @transform_3(%arg0: i32) -> (i32, i32) {
    %c0_i32 = arith.constant 0 : i32
    %c0_i32_0 = arith.constant 0 : i32
    %c0_i32_1 = arith.constant 0 : i32
    return %c0_i32, %c0_i32_0 : i32, i32
  }
  func.func @transform_4(%arg0: i32) -> (i32, i32) {
    %c0_i32 = arith.constant 0 : i32
    %c0_i32_0 = arith.constant 0 : i32
    %c0_i32_1 = arith.constant 0 : i32
    return %c0_i32, %c0_i32_0 : i32, i32
  }
  func.func @transform_5(%arg0: i32) -> (i32, i32) {
    %c0_i32 = arith.constant 0 : i32
    %c0_i32_0 = arith.constant 0 : i32
    %c0_i32_1 = arith.constant 0 : i32
    return %c0_i32, %c0_i32_0 : i32, i32
  }
  func.func @transform_6(%arg0: i32) -> (i32, i32) {
    %c0_i32 = arith.constant 0 : i32
    %c0_i32_0 = arith.constant 0 : i32
    %c0_i32_1 = arith.constant 0 : i32
    return %c0_i32, %c0_i32_0 : i32, i32
  }
  func.func @transform_7(%arg0: i32) -> (i32, i32) {
    %c0_i32 = arith.constant 0 : i32
    %c0_i32_0 = arith.constant 0 : i32
    return %arg0, %c0_i32 : i32, i32
  }
}

</mosaic_0001>

<llo_original>
// kernel: _lambda_.1
$region0: #{_lambda_.1}
  #allocation0 [shape = 'u32[]', space=smem, size = 0x4, offset = 0x4, fixed_abs, tag = 'smem constant byte address 0x4 - core index']
  #allocation1 [shape = 'u32[72,128]{1,0:T(1,128)}', space=vmem, size = 0x9000, scoped, tag = 'internal scratch']
  %s0 = inlined_call_operand.vmem [shape: f32[200,32], index: 0, kind: input, shape index: {}]
  %s1 = inlined_call_operand.vmem [shape: bf16[32,64], index: 1, kind: input, shape index: {}]
  %s2 = inlined_call_operand.vmem [shape: f32[8,64], index: 2, kind: input, shape index: {}]
  %s3 = inlined_call_operand.vmem [shape: bf16[64,128], index: 3, kind: input, shape index: {}]
  %s4 = inlined_call_operand.vmem [shape: f32[1,128], index: 4, kind: input, shape index: {}]
  %s5 = inlined_call_operand.vmem [shape: bf16[128,128], index: 5, kind: input, shape index: {}]
  %s6 = inlined_call_operand.vmem [shape: f32[1,128], index: 6, kind: input, shape index: {}]
  %s7 = inlined_call_operand.vmem [shape: f32[200,128], index: 7, kind: output, shape index: {}]
  %s8 = sld [smem:[#allocation0]]
  $region38: #{_lambda_.1} parent=0
    _
  %s10 = ssub.s32 1, %s8
  %s11 = scalar_select 0, %s10, %s8
  // Predicated region
  $region2: #{_lambda_.1} parent=0 // pred_check
    _
  $region3: #{_lambda_.1} parent=0 // pred_check_branch
    %13 = sbr.rel (0) target = $region5
  $region4: #{_lambda_.1} parent=0 // pred_region
    _
  $region5: #{_lambda_.1} parent=0 // pred_fallthru
    _
  // Predicated region
  $region6: #{_lambda_.1} parent=0 // pred_check
    _
  $region7: #{_lambda_.1} parent=0 // pred_check_branch
    %15 = sbr.rel (0) target = $region9
  $region8: #{_lambda_.1} parent=0 // pred_region
    _
  $region9: #{_lambda_.1} parent=0 // pred_fallthru
    _
  // Predicated region
  $region10: #{_lambda_.1} parent=0 // pred_check
    _
  $region11: #{_lambda_.1} parent=0 // pred_check_branch
    %17 = sbr.rel (0) target = $region13
  $region12: #{_lambda_.1} parent=0 // pred_region
    _
  $region13: #{_lambda_.1} parent=0 // pred_fallthru
    _
  // Predicated region
  $region14: #{_lambda_.1} parent=0 // pred_check
    _
  $region15: #{_lambda_.1} parent=0 // pred_check_branch
    %19 = sbr.rel (0) target = $region17
  $region16: #{_lambda_.1} parent=0 // pred_region
    _
  $region17: #{_lambda_.1} parent=0 // pred_fallthru
    _
  // Predicated region
  $region18: #{_lambda_.1} parent=0 // pred_check
    _
  $region19: #{_lambda_.1} parent=0 // pred_check_branch
    %21 = sbr.rel (0) target = $region21
  $region20: #{_lambda_.1} parent=0 // pred_region
    _
  $region21: #{_lambda_.1} parent=0 // pred_fallthru
    _
  // Predicated region
  $region22: #{_lambda_.1} parent=0 // pred_check
    _
  $region23: #{_lambda_.1} parent=0 // pred_check_branch
    %23 = sbr.rel (0) target = $region25
  $region24: #{_lambda_.1} parent=0 // pred_region
    _
  $region25: #{_lambda_.1} parent=0 // pred_fallthru
    _
  // Predicated region
  $region26: #{_lambda_.1} parent=0 // pred_check
    _
  $region27: #{_lambda_.1} parent=0 // pred_check_branch
    %25 = sbr.rel (0) target = $region29
  $region28: #{_lambda_.1} parent=0 // pred_region
    _
  $region29: #{_lambda_.1} parent=0 // pred_fallthru
    _
  %v27 = vld [vmem:[%s0] sm:$0xff]
  %v28 = vld [vmem:[%s0 + $0x8] sm:$0xff]
  %v29 = vld [vmem:[%s0 + $0x10] sm:$0xff]
  %v30 = vld [vmem:[%s0 + $0x18] sm:$0xff]
  %v31 = vld [vmem:[%s0 + $0x20] sm:$0xff]
  %v32 = vld [vmem:[%s0 + $0x28] sm:$0xff]
  %v33 = vld [vmem:[%s0 + $0x30] sm:$0xff]
  %v34 = vld [vmem:[%s0 + $0x38] sm:$0xff]
  %v35 = vld [vmem:[%s0 + $0x40] sm:$0xff]
  %v36 = vld [vmem:[%s0 + $0x48] sm:$0xff]
  %v37 = vld [vmem:[%s0 + $0x50] sm:$0xff]
  %v38 = vld [vmem:[%s0 + $0x58] sm:$0xff]
  %v39 = vld [vmem:[%s0 + $0x60] sm:$0xff]
  %v40 = vld [vmem:[%s0 + $0x68] sm:$0xff]
  %v41 = vld [vmem:[%s0 + $0x70] sm:$0xff]
  %v42 = vld [vmem:[%s0 + $0x78] sm:$0xff]
  %v43 = vld [vmem:[%s0 + $0x80] sm:$0xff]
  %v44 = vld [vmem:[%s0 + $0x88] sm:$0xff]
  %v45 = vld [vmem:[%s0 + $0x90] sm:$0xff]
  %v46 = vld [vmem:[%s0 + $0x98] sm:$0xff]
  %v47 = vld [vmem:[%s0 + $0xa0] sm:$0xff]
  %v48 = vld [vmem:[%s0 + $0xa8] sm:$0xff]
  %v49 = vld [vmem:[%s0 + $0xb0] sm:$0xff]
  %v50 = vld [vmem:[%s0 + $0xb8] sm:$0xff]
  %v51 = vld [vmem:[%s0 + $0xc0] sm:$0xff]
  %v52 = vpack.c.bf16 %v28, %v27
  %v53 = vpack.c.bf16 %v30, %v29
  %v54 = vpack.c.bf16 %v32, %v31
  %v55 = vpack.c.bf16 %v34, %v33
  %v56 = vpack.c.bf16 %v36, %v35
  %v57 = vpack.c.bf16 %v38, %v37
  %v58 = vpack.c.bf16 %v40, %v39
  %v59 = vpack.c.bf16 %v42, %v41
  %v60 = vpack.c.bf16 %v44, %v43
  %v61 = vpack.c.bf16 %v46, %v45
  %v62 = vpack.c.bf16 %v48, %v47
  %v63 = vpack.c.bf16 %v50, %v49
  %v64 = vpack.c.bf16 %v51, %v51
  %v65 = vld [vmem:[%s1] sm:$0xf]
  %v66 = vld [vmem:[%s1 + $0x4] sm:$0xf]
  %v67 = vld [vmem:[%s1 + $0x8] sm:$0xf]
  %v68 = vld [vmem:[%s1 + $0xc] sm:$0xf]
  %v69 = vld [vmem:[%s2] sm:$0x1]
  %v70 = vperm.slane %v69, 0
  %v75 = vunpack.c.l.b16 %v65
  %v76 = vunpack.c.l.b16 %v66
  %v77 = vunpack.c.l.b16 %v67
  %v78 = vunpack.c.l.b16 %v68
  %v79 = vpack.c.b16 %v76, %v75
  %v80 = vpack.c.b16 %v78, %v77
  %vm83 = vcmask 261120
  %v85 = vsel %vm83, %v52, 0
  %v88 = vsel %vm83, %v53, 0
  %v91 = vsel %vm83, %v54, 0
  %v94 = vsel %vm83, %v55, 0
  %v97 = vsel %vm83, %v56, 0
  %v100 = vsel %vm83, %v57, 0
  %v103 = vsel %vm83, %v58, 0
  %v106 = vsel %vm83, %v59, 0
  %v109 = vsel %vm83, %v60, 0
  %v112 = vsel %vm83, %v61, 0
  %v115 = vsel %vm83, %v62, 0
  %v118 = vsel %vm83, %v63, 0
  %v121 = vsel %vm83, %v64, 0
  %123 = vmatpush.bf16.msra.mxu0 0
  %124 = vmatpush.bf16.msra.mxu0 0
  %125 = vmatpush.bf16.msra.mxu0 0
  %126 = vmatpush.bf16.msra.mxu0 0
  %127 = vmatpush.bf16.msra.mxu0 0
  %128 = vmatpush.bf16.msra.mxu0 0
  %129 = vmatpush.bf16.msra.mxu0 %v80
  %130 = vmatpush.bf16.msra.mxu0 %v79
  %131 = vmatmul.bf16.gmra.mxu0 %v85
  %v132 = vpop.f32.mrf.mxu0
  %v133 = vadd.f32 %v70, %v132
  %v134 = vpop.f32.mrf.mxu0
  %v135 = vadd.f32 %v70, %v134
  %136 = vmatmul.bf16.gmra.mxu0 %v88
  %v137 = vpop.f32.mrf.mxu0
  %v138 = vadd.f32 %v70, %v137
  %v139 = vpop.f32.mrf.mxu0
  %v140 = vadd.f32 %v70, %v139
  %141 = vmatmul.bf16.gmra.mxu0 %v91
  %v142 = vpop.f32.mrf.mxu0
  %v143 = vadd.f32 %v70, %v142
  %v144 = vpop.f32.mrf.mxu0
  %v145 = vadd.f32 %v70, %v144
  %146 = vmatmul.bf16.gmra.mxu0 %v94
  %v147 = vpop.f32.mrf.mxu0
  %v148 = vadd.f32 %v70, %v147
  %v149 = vpop.f32.mrf.mxu0
  %v150 = vadd.f32 %v70, %v149
  %151 = vmatmul.bf16.gmra.mxu0 %v97
  %v152 = vpop.f32.mrf.mxu0
  %v153 = vadd.f32 %v70, %v152
  %v154 = vpop.f32.mrf.mxu0
  %v155 = vadd.f32 %v70, %v154
  %156 = vmatmul.bf16.gmra.mxu0 %v100
  %v157 = vpop.f32.mrf.mxu0
  %v158 = vadd.f32 %v70, %v157
  %v159 = vpop.f32.mrf.mxu0
  %v160 = vadd.f32 %v70, %v159
  %161 = vmatmul.bf16.gmra.mxu0 %v103
  %v162 = vpop.f32.mrf.mxu0
  %v163 = vadd.f32 %v70, %v162
  %v164 = vpop.f32.mrf.mxu0
  %v165 = vadd.f32 %v70, %v164
  %166 = vmatmul.bf16.gmra.mxu0 %v106
  %v167 = vpop.f32.mrf.mxu0
  %v168 = vadd.f32 %v70, %v167
  %v169 = vpop.f32.mrf.mxu0
  %v170 = vadd.f32 %v70, %v169
  %171 = vmatmul.bf16.gmra.mxu0 %v109
  %v172 = vpop.f32.mrf.mxu0
  %v173 = vadd.f32 %v70, %v172
  %v174 = vpop.f32.mrf.mxu0
  %v175 = vadd.f32 %v70, %v174
  %176 = vmatmul.bf16.gmra.mxu0 %v112
  %v177 = vpop.f32.mrf.mxu0
  %v178 = vadd.f32 %v70, %v177
  %v179 = vpop.f32.mrf.mxu0
  %v180 = vadd.f32 %v70, %v179
  %181 = vmatmul.bf16.gmra.mxu0 %v115
  %v182 = vpop.f32.mrf.mxu0
  %v183 = vadd.f32 %v70, %v182
  %v184 = vpop.f32.mrf.mxu0
  %v185 = vadd.f32 %v70, %v184
  %186 = vmatmul.bf16.gmra.mxu0 %v118
  %v187 = vpop.f32.mrf.mxu0
  %v188 = vadd.f32 %v70, %v187
  %v189 = vpop.f32.mrf.mxu0
  %v190 = vadd.f32 %v70, %v189
  %191 = vmatmul.bf16.gmra.mxu0 %v121
  %v192 = vpop.f32.mrf.mxu0
  %v193 = vadd.f32 %v70, %v192
  %v194 = vpop.f32.mrf.mxu0
  %195 = vdwg.mxu0
  %vm196 = vcmask 523264
  %v197 = vsel %vm196, %v133, 0.0
  %198 = vadd.xlane.f32.xlu0 %v197
  %v199 = vpop.xlane.xlu0 %198
  %v200 = vsel %vm196, %v135, 0.0
  %201 = vadd.xlane.f32.xlu0 %v200
  %v202 = vpop.xlane.xlu0 %201
  %v203 = vsel %vm196, %v138, 0.0
  %204 = vadd.xlane.f32.xlu0 %v203
  %v205 = vpop.xlane.xlu0 %204
  %v206 = vsel %vm196, %v140, 0.0
  %207 = vadd.xlane.f32.xlu0 %v206
  %v208 = vpop.xlane.xlu0 %207
  %v209 = vsel %vm196, %v143, 0.0
  %210 = vadd.xlane.f32.xlu0 %v209
  %v211 = vpop.xlane.xlu0 %210
  %v212 = vsel %vm196, %v145, 0.0
  %213 = vadd.xlane.f32.xlu0 %v212
  %v214 = vpop.xlane.xlu0 %213
  %v215 = vsel %vm196, %v148, 0.0
  %216 = vadd.xlane.f32.xlu0 %v215
  %v217 = vpop.xlane.xlu0 %216
  %v218 = vsel %vm196, %v150, 0.0
  %219 = vadd.xlane.f32.xlu0 %v218
  %v220 = vpop.xlane.xlu0 %219
  %v221 = vsel %vm196, %v153, 0.0
  %222 = vadd.xlane.f32.xlu0 %v221
  %v223 = vpop.xlane.xlu0 %222
  %v224 = vsel %vm196, %v155, 0.0
  %225 = vadd.xlane.f32.xlu0 %v224
  %v226 = vpop.xlane.xlu0 %225
  %v227 = vsel %vm196, %v158, 0.0
  %228 = vadd.xlane.f32.xlu0 %v227
  %v229 = vpop.xlane.xlu0 %228
  %v230 = vsel %vm196, %v160, 0.0
  %231 = vadd.xlane.f32.xlu0 %v230
  %v232 = vpop.xlane.xlu0 %231
  %v233 = vsel %vm196, %v163, 0.0
  %234 = vadd.xlane.f32.xlu0 %v233
  %v235 = vpop.xlane.xlu0 %234
  %v236 = vsel %vm196, %v165, 0.0
  %237 = vadd.xlane.f32.xlu0 %v236
  %v238 = vpop.xlane.xlu0 %237
  %v239 = vsel %vm196, %v168, 0.0
  %240 = vadd.xlane.f32.xlu0 %v239
  %v241 = vpop.xlane.xlu0 %240
  %v242 = vsel %vm196, %v170, 0.0
  %243 = vadd.xlane.f32.xlu0 %v242
  %v244 = vpop.xlane.xlu0 %243
  %v245 = vsel %vm196, %v173, 0.0
  %246 = vadd.xlane.f32.xlu0 %v245
  %v247 = vpop.xlane.xlu0 %246
  %v248 = vsel %vm196, %v175, 0.0
  %249 = vadd.xlane.f32.xlu0 %v248
  %v250 = vpop.xlane.xlu0 %249
  %v251 = vsel %vm196, %v178, 0.0
  %252 = vadd.xlane.f32.xlu0 %v251
  %v253 = vpop.xlane.xlu0 %252
  %v254 = vsel %vm196, %v180, 0.0
  %255 = vadd.xlane.f32.xlu0 %v254
  %v256 = vpop.xlane.xlu0 %255
  %v257 = vsel %vm196, %v183, 0.0
  %258 = vadd.xlane.f32.xlu0 %v257
  %v259 = vpop.xlane.xlu0 %258
  %v260 = vsel %vm196, %v185, 0.0
  %261 = vadd.xlane.f32.xlu0 %v260
  %v262 = vpop.xlane.xlu0 %261
  %v263 = vsel %vm196, %v188, 0.0
  %264 = vadd.xlane.f32.xlu0 %v263
  %v265 = vpop.xlane.xlu0 %264
  %v266 = vsel %vm196, %v190, 0.0
  %267 = vadd.xlane.f32.xlu0 %v266
  %v268 = vpop.xlane.xlu0 %267
  %v269 = vsel %vm196, %v193, 0.0
  %270 = vadd.xlane.f32.xlu0 %v269
  %v271 = vpop.xlane.xlu0 %270
  %v272 = vmul.f32 %v199, 0.015625
  %v273 = vmul.f32 %v202, 0.015625
  %v274 = vmul.f32 %v205, 0.015625
  %v275 = vmul.f32 %v208, 0.015625
  %v276 = vmul.f32 %v211, 0.015625
  %v277 = vmul.f32 %v214, 0.015625
  %v278 = vmul.f32 %v217, 0.015625
  %v279 = vmul.f32 %v220, 0.015625
  %v280 = vmul.f32 %v223, 0.015625
  %v281 = vmul.f32 %v226, 0.015625
  %v282 = vmul.f32 %v229, 0.015625
  %v283 = vmul.f32 %v232, 0.015625
  %v284 = vmul.f32 %v235, 0.015625
  %v285 = vmul.f32 %v238, 0.015625
  %v286 = vmul.f32 %v241, 0.015625
  %v287 = vmul.f32 %v244, 0.015625
  %v288 = vmul.f32 %v247, 0.015625
  %v289 = vmul.f32 %v250, 0.015625
  %v290 = vmul.f32 %v253, 0.015625
  %v291 = vmul.f32 %v256, 0.015625
  %v292 = vmul.f32 %v259, 0.015625
  %v293 = vmul.f32 %v262, 0.015625
  %v294 = vmul.f32 %v265, 0.015625
  %v295 = vmul.f32 %v268, 0.015625
  %v296 = vmul.f32 %v271, 0.015625
  %v297 = vmul.f32 %v133, %v133
  %v298 = vmul.f32 %v135, %v135
  %v299 = vmul.f32 %v138, %v138
  %v300 = vmul.f32 %v140, %v140
  %v301 = vmul.f32 %v143, %v143
  %v302 = vmul.f32 %v145, %v145
  %v303 = vmul.f32 %v148, %v148
  %v304 = vmul.f32 %v150, %v150
  %v305 = vmul.f32 %v153, %v153
  %v306 = vmul.f32 %v155, %v155
  %v307 = vmul.f32 %v158, %v158
  %v308 = vmul.f32 %v160, %v160
  %v309 = vmul.f32 %v163, %v163
  %v310 = vmul.f32 %v165, %v165
  %v311 = vmul.f32 %v168, %v168
  %v312 = vmul.f32 %v170, %v170
  %v313 = vmul.f32 %v173, %v173
  %v314 = vmul.f32 %v175, %v175
  %v315 = vmul.f32 %v178, %v178
  %v316 = vmul.f32 %v180, %v180
  %v317 = vmul.f32 %v183, %v183
  %v318 = vmul.f32 %v185, %v185
  %v319 = vmul.f32 %v188, %v188
  %v320 = vmul.f32 %v190, %v190
  %v321 = vmul.f32 %v193, %v193
  %v322 = vsel %vm196, %v297, 0.0
  %323 = vadd.xlane.f32.xlu0 %v322
  %v324 = vpop.xlane.xlu0 %323
  %v325 = vsel %vm196, %v298, 0.0
  %326 = vadd.xlane.f32.xlu0 %v325
  %v327 = vpop.xlane.xlu0 %326
  %v328 = vsel %vm196, %v299, 0.0
  %329 = vadd.xlane.f32.xlu0 %v328
  %v330 = vpop.xlane.xlu0 %329
  %v331 = vsel %vm196, %v300, 0.0
  %332 = vadd.xlane.f32.xlu0 %v331
  %v333 = vpop.xlane.xlu0 %332
  %v334 = vsel %vm196, %v301, 0.0
  %335 = vadd.xlane.f32.xlu0 %v334
  %v336 = vpop.xlane.xlu0 %335
  %v337 = vsel %vm196, %v302, 0.0
  %338 = vadd.xlane.f32.xlu0 %v337
  %v339 = vpop.xlane.xlu0 %338
  %v340 = vsel %vm196, %v303, 0.0
  %341 = vadd.xlane.f32.xlu0 %v340
  %v342 = vpop.xlane.xlu0 %341
  %v343 = vsel %vm196, %v304, 0.0
  %344 = vadd.xlane.f32.xlu0 %v343
  %v345 = vpop.xlane.xlu0 %344
  %v346 = vsel %vm196, %v305, 0.0
  %347 = vadd.xlane.f32.xlu0 %v346
  %v348 = vpop.xlane.xlu0 %347
  %v349 = vsel %vm196, %v306, 0.0
  %350 = vadd.xlane.f32.xlu0 %v349
  %v351 = vpop.xlane.xlu0 %350
  %v352 = vsel %vm196, %v307, 0.0
  %353 = vadd.xlane.f32.xlu0 %v352
  %v354 = vpop.xlane.xlu0 %353
  %v355 = vsel %vm196, %v308, 0.0
  %356 = vadd.xlane.f32.xlu0 %v355
  %v357 = vpop.xlane.xlu0 %356
  %v358 = vsel %vm196, %v309, 0.0
  %359 = vadd.xlane.f32.xlu0 %v358
  %v360 = vpop.xlane.xlu0 %359
  %v361 = vsel %vm196, %v310, 0.0
  %362 = vadd.xlane.f32.xlu0 %v361
  %v363 = vpop.xlane.xlu0 %362
  %v364 = vsel %vm196, %v311, 0.0
  %365 = vadd.xlane.f32.xlu0 %v364
  %v366 = vpop.xlane.xlu0 %365
  %v367 = vsel %vm196, %v312, 0.0
  %368 = vadd.xlane.f32.xlu0 %v367
  %v369 = vpop.xlane.xlu0 %368
  %v370 = vsel %vm196, %v313, 0.0
  %371 = vadd.xlane.f32.xlu0 %v370
  %v372 = vpop.xlane.xlu0 %371
  %v373 = vsel %vm196, %v314, 0.0
  %374 = vadd.xlane.f32.xlu0 %v373
  %v375 = vpop.xlane.xlu0 %374
  %v376 = vsel %vm196, %v315, 0.0
  %377 = vadd.xlane.f32.xlu0 %v376
  %v378 = vpop.xlane.xlu0 %377
  %v379 = vsel %vm196, %v316, 0.0
  %380 = vadd.xlane.f32.xlu0 %v379
  %v381 = vpop.xlane.xlu0 %380
  %v382 = vsel %vm196, %v317, 0.0
  %383 = vadd.xlane.f32.xlu0 %v382
  %v384 = vpop.xlane.xlu0 %383
  %v385 = vsel %vm196, %v318, 0.0
  %386 = vadd.xlane.f32.xlu0 %v385
  %v387 = vpop.xlane.xlu0 %386
  %v388 = vsel %vm196, %v319, 0.0
  %389 = vadd.xlane.f32.xlu0 %v388
  %v390 = vpop.xlane.xlu0 %389
  %v391 = vsel %vm196, %v320, 0.0
  %392 = vadd.xlane.f32.xlu0 %v391
  %v393 = vpop.xlane.xlu0 %392
  %v394 = vsel %vm196, %v321, 0.0
  %395 = vadd.xlane.f32.xlu0 %v394
  %v396 = vpop.xlane.xlu0 %395
  %v397 = vmul.f32 %v324, 0.015625
  %v398 = vmul.f32 %v327, 0.015625
  %v399 = vmul.f32 %v330, 0.015625
  %v400 = vmul.f32 %v333, 0.015625
  %v401 = vmul.f32 %v336, 0.015625
  %v402 = vmul.f32 %v339, 0.015625
  %v403 = vmul.f32 %v342, 0.015625
  %v404 = vmul.f32 %v345, 0.015625
  %v405 = vmul.f32 %v348, 0.015625
  %v406 = vmul.f32 %v351, 0.015625
  %v407 = vmul.f32 %v354, 0.015625
  %v408 = vmul.f32 %v357, 0.015625
  %v409 = vmul.f32 %v360, 0.015625
  %v410 = vmul.f32 %v363, 0.015625
  %v411 = vmul.f32 %v366, 0.015625
  %v412 = vmul.f32 %v369, 0.015625
  %v413 = vmul.f32 %v372, 0.015625
  %v414 = vmul.f32 %v375, 0.015625
  %v415 = vmul.f32 %v378, 0.015625
  %v416 = vmul.f32 %v381, 0.015625
  %v417 = vmul.f32 %v384, 0.015625
  %v418 = vmul.f32 %v387, 0.015625
  %v419 = vmul.f32 %v390, 0.015625
  %v420 = vmul.f32 %v393, 0.015625
  %v421 = vmul.f32 %v396, 0.015625
  %v422 = vmul.f32 %v272, %v272
  %v423 = vmul.f32 %v273, %v273
  %v424 = vmul.f32 %v274, %v274
  %v425 = vmul.f32 %v275, %v275
  %v426 = vmul.f32 %v276, %v276
  %v427 = vmul.f32 %v277, %v277
  %v428 = vmul.f32 %v278, %v278
  %v429 = vmul.f32 %v279, %v279
  %v430 = vmul.f32 %v280, %v280
  %v431 = vmul.f32 %v281, %v281
  %v432 = vmul.f32 %v282, %v282
  %v433 = vmul.f32 %v283, %v283
  %v434 = vmul.f32 %v284, %v284
  %v435 = vmul.f32 %v285, %v285
  %v436 = vmul.f32 %v286, %v286
  %v437 = vmul.f32 %v287, %v287
  %v438 = vmul.f32 %v288, %v288
  %v439 = vmul.f32 %v289, %v289
  %v440 = vmul.f32 %v290, %v290
  %v441 = vmul.f32 %v291, %v291
  %v442 = vmul.f32 %v292, %v292
  %v443 = vmul.f32 %v293, %v293
  %v444 = vmul.f32 %v294, %v294
  %v445 = vmul.f32 %v295, %v295
  %v446 = vmul.f32 %v296, %v296
  %v447 = vsub.f32 %v397, %v422
  %v448 = vsub.f32 %v398, %v423
  %v449 = vsub.f32 %v399, %v424
  %v450 = vsub.f32 %v400, %v425
  %v451 = vsub.f32 %v401, %v426
  %v452 = vsub.f32 %v402, %v427
  %v453 = vsub.f32 %v403, %v428
  %v454 = vsub.f32 %v404, %v429
  %v455 = vsub.f32 %v405, %v430
  %v456 = vsub.f32 %v406, %v431
  %v457 = vsub.f32 %v407, %v432
  %v458 = vsub.f32 %v408, %v433
  %v459 = vsub.f32 %v409, %v434
  %v460 = vsub.f32 %v410, %v435
  %v461 = vsub.f32 %v411, %v436
  %v462 = vsub.f32 %v412, %v437
  %v463 = vsub.f32 %v413, %v438
  %v464 = vsub.f32 %v414, %v439
  %v465 = vsub.f32 %v415, %v440
  %v466 = vsub.f32 %v416, %v441
  %v467 = vsub.f32 %v417, %v442
  %v468 = vsub.f32 %v418, %v443
  %v469 = vsub.f32 %v419, %v444
  %v470 = vsub.f32 %v420, %v445
  %v471 = vsub.f32 %v421, %v446
  %v472 = vmax.f32 %v447, 0.0
  %v473 = vmax.f32 %v448, 0.0
  %v474 = vmax.f32 %v449, 0.0
  %v475 = vmax.f32 %v450, 0.0
  %v476 = vmax.f32 %v451, 0.0
  %v477 = vmax.f32 %v452, 0.0
  %v478 = vmax.f32 %v453, 0.0
  %v479 = vmax.f32 %v454, 0.0
  %v480 = vmax.f32 %v455, 0.0
  %v481 = vmax.f32 %v456, 0.0
  %v482 = vmax.f32 %v457, 0.0
  %v483 = vmax.f32 %v458, 0.0
  %v484 = vmax.f32 %v459, 0.0
  %v485 = vmax.f32 %v460, 0.0
  %v486 = vmax.f32 %v461, 0.0
  %v487 = vmax.f32 %v462, 0.0
  %v488 = vmax.f32 %v463, 0.0
  %v489 = vmax.f32 %v464, 0.0
  %v490 = vmax.f32 %v465, 0.0
  %v491 = vmax.f32 %v466, 0.0
  %v492 = vmax.f32 %v467, 0.0
  %v493 = vmax.f32 %v468, 0.0
  %v494 = vmax.f32 %v469, 0.0
  %v495 = vmax.f32 %v470, 0.0
  %v496 = vmax.f32 %v471, 0.0
  %v497 = vadd.f32 %v472, 1e-05
  %v498 = vadd.f32 %v473, 1e-05
  %v499 = vadd.f32 %v474, 1e-05
  %v500 = vadd.f32 %v475, 1e-05
  %v501 = vadd.f32 %v476, 1e-05
  %v502 = vadd.f32 %v477, 1e-05
  %v503 = vadd.f32 %v478, 1e-05
  %v504 = vadd.f32 %v479, 1e-05
  %v505 = vadd.f32 %v480, 1e-05
  %v506 = vadd.f32 %v481, 1e-05
  %v507 = vadd.f32 %v482, 1e-05
  %v508 = vadd.f32 %v483, 1e-05
  %v509 = vadd.f32 %v484, 1e-05
  %v510 = vadd.f32 %v485, 1e-05
  %v511 = vadd.f32 %v486, 1e-05
  %v512 = vadd.f32 %v487, 1e-05
  %v513 = vadd.f32 %v488, 1e-05
  %v514 = vadd.f32 %v489, 1e-05
  %v515 = vadd.f32 %v490, 1e-05
  %v516 = vadd.f32 %v491, 1e-05
  %v517 = vadd.f32 %v492, 1e-05
  %v518 = vadd.f32 %v493, 1e-05
  %v519 = vadd.f32 %v494, 1e-05
  %v520 = vadd.f32 %v495, 1e-05
  %v521 = vadd.f32 %v496, 1e-05
  %v522 = vrsqrt.pop %v497
  %v523 = vmul.f32 %v522, %v497
  %v524 = vmul.f32 %v523, %v522
  %v525 = vmul.f32 0.5, %v524
  %v526 = vsub.f32 1.5, %v525
  %v527 = vmul.f32 %v522, %v526
  %vm528 = vweird.f32 %v497
  %vm529 = vweird.f32 %v522
  %vm530 = vmor %vm528, %vm529
  %v531 = vsel %vm530, %v522, %v527
  %v532 = vrsqrt.pop %v498
  %v533 = vmul.f32 %v532, %v498
  %v534 = vmul.f32 %v533, %v532
  %v535 = vmul.f32 0.5, %v534
  %v536 = vsub.f32 1.5, %v535
  %v537 = vmul.f32 %v532, %v536
  %vm538 = vweird.f32 %v498
  %vm539 = vweird.f32 %v532
  %vm540 = vmor %vm538, %vm539
  %v541 = vsel %vm540, %v532, %v537
  %v542 = vrsqrt.pop %v499
  %v543 = vmul.f32 %v542, %v499
  %v544 = vmul.f32 %v543, %v542
  %v545 = vmul.f32 0.5, %v544
  %v546 = vsub.f32 1.5, %v545
  %v547 = vmul.f32 %v542, %v546
  %vm548 = vweird.f32 %v499
  %vm549 = vweird.f32 %v542
  %vm550 = vmor %vm548, %vm549
  %v551 = vsel %vm550, %v542, %v547
  %v552 = vrsqrt.pop %v500
  %v553 = vmul.f32 %v552, %v500
  %v554 = vmul.f32 %v553, %v552
  %v555 = vmul.f32 0.5, %v554
  %v556 = vsub.f32 1.5, %v555
  %v557 = vmul.f32 %v552, %v556
  %vm558 = vweird.f32 %v500
  %vm559 = vweird.f32 %v552
  %vm560 = vmor %vm558, %vm559
  %v561 = vsel %vm560, %v552, %v557
  %v562 = vrsqrt.pop %v501
  %v563 = vmul.f32 %v562, %v501
  %v564 = vmul.f32 %v563, %v562
  %v565 = vmul.f32 0.5, %v564
  %v566 = vsub.f32 1.5, %v565
  %v567 = vmul.f32 %v562, %v566
  %vm568 = vweird.f32 %v501
  %vm569 = vweird.f32 %v562
  %vm570 = vmor %vm568, %vm569
  %v571 = vsel %vm570, %v562, %v567
  %v572 = vrsqrt.pop %v502
  %v573 = vmul.f32 %v572, %v502
  %v574 = vmul.f32 %v573, %v572
  %v575 = vmul.f32 0.5, %v574
  %v576 = vsub.f32 1.5, %v575
  %v577 = vmul.f32 %v572, %v576
  %vm578 = vweird.f32 %v502
  %vm579 = vweird.f32 %v572
  %vm580 = vmor %vm578, %vm579
  %v581 = vsel %vm580, %v572, %v577
  %v582 = vrsqrt.pop %v503
  %v583 = vmul.f32 %v582, %v503
  %v584 = vmul.f32 %v583, %v582
  %v585 = vmul.f32 0.5, %v584
  %v586 = vsub.f32 1.5, %v585
  %v587 = vmul.f32 %v582, %v586
  %vm588 = vweird.f32 %v503
  %vm589 = vweird.f32 %v582
  %vm590 = vmor %vm588, %vm589
  %v591 = vsel %vm590, %v582, %v587
  %v592 = vrsqrt.pop %v504
  %v593 = vmul.f32 %v592, %v504
  %v594 = vmul.f32 %v593, %v592
  %v595 = vmul.f32 0.5, %v594
  %v596 = vsub.f32 1.5, %v595
  %v597 = vmul.f32 %v592, %v596
  %vm598 = vweird.f32 %v504
  %vm599 = vweird.f32 %v592
  %vm600 = vmor %vm598, %vm599
  %v601 = vsel %vm600, %v592, %v597
  %v602 = vrsqrt.pop %v505
  %v603 = vmul.f32 %v602, %v505
  %v604 = vmul.f32 %v603, %v602
  %v605 = vmul.f32 0.5, %v604
  %v606 = vsub.f32 1.5, %v605
  %v607 = vmul.f32 %v602, %v606
  %vm608 = vweird.f32 %v505
  %vm609 = vweird.f32 %v602
  %vm610 = vmor %vm608, %vm609
  %v611 = vsel %vm610, %v602, %v607
  %v612 = vrsqrt.pop %v506
  %v613 = vmul.f32 %v612, %v506
  %v614 = vmul.f32 %v613, %v612
  %v615 = vmul.f32 0.5, %v614
  %v616 = vsub.f32 1.5, %v615
  %v617 = vmul.f32 %v612, %v616
  %vm618 = vweird.f32 %v506
  %vm619 = vweird.f32 %v612
  %vm620 = vmor %vm618, %vm619
  %v621 = vsel %vm620, %v612, %v617
  %v622 = vrsqrt.pop %v507
  %v623 = vmul.f32 %v622, %v507
  %v624 = vmul.f32 %v623, %v622
  %v625 = vmul.f32 0.5, %v624
  %v626 = vsub.f32 1.5, %v625
  %v627 = vmul.f32 %v622, %v626
  %vm628 = vweird.f32 %v507
  %vm629 = vweird.f32 %v622
  %vm630 = vmor %vm628, %vm629
  %v631 = vsel %vm630, %v622, %v627
  %v632 = vrsqrt.pop %v508
  %v633 = vmul.f32 %v632, %v508
  %v634 = vmul.f32 %v633, %v632
  %v635 = vmul.f32 0.5, %v634
  %v636 = vsub.f32 1.5, %v635
  %v637 = vmul.f32 %v632, %v636
  %vm638 = vweird.f32 %v508
  %vm639 = vweird.f32 %v632
  %vm640 = vmor %vm638, %vm639
  %v641 = vsel %vm640, %v632, %v637
  %v642 = vrsqrt.pop %v509
  %v643 = vmul.f32 %v642, %v509
  %v644 = vmul.f32 %v643, %v642
  %v645 = vmul.f32 0.5, %v644
  %v646 = vsub.f32 1.5, %v645
  %v647 = vmul.f32 %v642, %v646
  %vm648 = vweird.f32 %v509
  %vm649 = vweird.f32 %v642
  %vm650 = vmor %vm648, %vm649
  %v651 = vsel %vm650, %v642, %v647
  %v652 = vrsqrt.pop %v510
  %v653 = vmul.f32 %v652, %v510
  %v654 = vmul.f32 %v653, %v652
  %v655 = vmul.f32 0.5, %v654
  %v656 = vsub.f32 1.5, %v655
  %v657 = vmul.f32 %v652, %v656
  %vm658 = vweird.f32 %v510
  %vm659 = vweird.f32 %v652
  %vm660 = vmor %vm658, %vm659
  %v661 = vsel %vm660, %v652, %v657
  %v662 = vrsqrt.pop %v511
  %v663 = vmul.f32 %v662, %v511
  %v664 = vmul.f32 %v663, %v662
  %v665 = vmul.f32 0.5, %v664
  %v666 = vsub.f32 1.5, %v665
  %v667 = vmul.f32 %v662, %v666
  %vm668 = vweird.f32 %v511
  %vm669 = vweird.f32 %v662
  %vm670 = vmor %vm668, %vm669
  %v671 = vsel %vm670, %v662, %v667
  %v672 = vrsqrt.pop %v512
  %v673 = vmul.f32 %v672, %v512
  %v674 = vmul.f32 %v673, %v672
  %v675 = vmul.f32 0.5, %v674
  %v676 = vsub.f32 1.5, %v675
  %v677 = vmul.f32 %v672, %v676
  %vm678 = vweird.f32 %v512
  %vm679 = vweird.f32 %v672
  %vm680 = vmor %vm678, %vm679
  %v681 = vsel %vm680, %v672, %v677
  %v682 = vrsqrt.pop %v513
  %v683 = vmul.f32 %v682, %v513
  %v684 = vmul.f32 %v683, %v682
  %v685 = vmul.f32 0.5, %v684
  %v686 = vsub.f32 1.5, %v685
  %v687 = vmul.f32 %v682, %v686
  %vm688 = vweird.f32 %v513
  %vm689 = vweird.f32 %v682
  %vm690 = vmor %vm688, %vm689
  %v691 = vsel %vm690, %v682, %v687
  %v692 = vrsqrt.pop %v514
  %v693 = vmul.f32 %v692, %v514
  %v694 = vmul.f32 %v693, %v692
  %v695 = vmul.f32 0.5, %v694
  %v696 = vsub.f32 1.5, %v695
  %v697 = vmul.f32 %v692, %v696
  %vm698 = vweird.f32 %v514
  %vm699 = vweird.f32 %v692
  %vm700 = vmor %vm698, %vm699
  %v701 = vsel %vm700, %v692, %v697
  %v702 = vrsqrt.pop %v515
  %v703 = vmul.f32 %v702, %v515
  %v704 = vmul.f32 %v703, %v702
  %v705 = vmul.f32 0.5, %v704
  %v706 = vsub.f32 1.5, %v705
  %v707 = vmul.f32 %v702, %v706
  %vm708 = vweird.f32 %v515
  %vm709 = vweird.f32 %v702
  %vm710 = vmor %vm708, %vm709
  %v711 = vsel %vm710, %v702, %v707
  %v712 = vrsqrt.pop %v516
  %v713 = vmul.f32 %v712, %v516
  %v714 = vmul.f32 %v713, %v712
  %v715 = vmul.f32 0.5, %v714
  %v716 = vsub.f32 1.5, %v715
  %v717 = vmul.f32 %v712, %v716
  %vm718 = vweird.f32 %v516
  %vm719 = vweird.f32 %v712
  %vm720 = vmor %vm718, %vm719
  %v721 = vsel %vm720, %v712, %v717
  %v722 = vrsqrt.pop %v517
  %v723 = vmul.f32 %v722, %v517
  %v724 = vmul.f32 %v723, %v722
  %v725 = vmul.f32 0.5, %v724
  %v726 = vsub.f32 1.5, %v725
  %v727 = vmul.f32 %v722, %v726
  %vm728 = vweird.f32 %v517
  %vm729 = vweird.f32 %v722
  %vm730 = vmor %vm728, %vm729
  %v731 = vsel %vm730, %v722, %v727
  %v732 = vrsqrt.pop %v518
  %v733 = vmul.f32 %v732, %v518
  %v734 = vmul.f32 %v733, %v732
  %v735 = vmul.f32 0.5, %v734
  %v736 = vsub.f32 1.5, %v735
  %v737 = vmul.f32 %v732, %v736
  %vm738 = vweird.f32 %v518
  %vm739 = vweird.f32 %v732
  %vm740 = vmor %vm738, %vm739
  %v741 = vsel %vm740, %v732, %v737
  %v742 = vrsqrt.pop %v519
  %v743 = vmul.f32 %v742, %v519
  %v744 = vmul.f32 %v743, %v742
  %v745 = vmul.f32 0.5, %v744
  %v746 = vsub.f32 1.5, %v745
  %v747 = vmul.f32 %v742, %v746
  %vm748 = vweird.f32 %v519
  %vm749 = vweird.f32 %v742
  %vm750 = vmor %vm748, %vm749
  %v751 = vsel %vm750, %v742, %v747
  %v752 = vrsqrt.pop %v520
  %v753 = vmul.f32 %v752, %v520
  %v754 = vmul.f32 %v753, %v752
  %v755 = vmul.f32 0.5, %v754
  %v756 = vsub.f32 1.5, %v755
  %v757 = vmul.f32 %v752, %v756
  %vm758 = vweird.f32 %v520
  %vm759 = vweird.f32 %v752
  %vm760 = vmor %vm758, %vm759
  %v761 = vsel %vm760, %v752, %v757
  %v762 = vrsqrt.pop %v521
  %v763 = vmul.f32 %v762, %v521
  %v764 = vmul.f32 %v763, %v762
  %v765 = vmul.f32 0.5, %v764
  %v766 = vsub.f32 1.5, %v765
  %v767 = vmul.f32 %v762, %v766
  %vm768 = vweird.f32 %v521
  %vm769 = vweird.f32 %v762
  %vm770 = vmor %vm768, %vm769
  %v771 = vsel %vm770, %v762, %v767
  %v772 = vsub.f32 %v133, %v272
  %v773 = vsub.f32 %v135, %v273
  %v774 = vsub.f32 %v138, %v274
  %v775 = vsub.f32 %v140, %v275
  %v776 = vsub.f32 %v143, %v276
  %v777 = vsub.f32 %v145, %v277
  %v778 = vsub.f32 %v148, %v278
  %v779 = vsub.f32 %v150, %v279
  %v780 = vsub.f32 %v153, %v280
  %v781 = vsub.f32 %v155, %v281
  %v782 = vsub.f32 %v158, %v282
  %v783 = vsub.f32 %v160, %v283
  %v784 = vsub.f32 %v163, %v284
  %v785 = vsub.f32 %v165, %v285
  %v786 = vsub.f32 %v168, %v286
  %v787 = vsub.f32 %v170, %v287
  %v788 = vsub.f32 %v173, %v288
  %v789 = vsub.f32 %v175, %v289
  %v790 = vsub.f32 %v178, %v290
  %v791 = vsub.f32 %v180, %v291
  %v792 = vsub.f32 %v183, %v292
  %v793 = vsub.f32 %v185, %v293
  %v794 = vsub.f32 %v188, %v294
  %v795 = vsub.f32 %v190, %v295
  %v796 = vsub.f32 %v193, %v296
  %v797 = vmul.f32 %v772, %v531
  %v798 = vmul.f32 %v773, %v541
  %v799 = vmul.f32 %v774, %v551
  %v800 = vmul.f32 %v775, %v561
  %v801 = vmul.f32 %v776, %v571
  %v802 = vmul.f32 %v777, %v581
  %v803 = vmul.f32 %v778, %v591
  %v804 = vmul.f32 %v779, %v601
  %v805 = vmul.f32 %v780, %v611
  %v806 = vmul.f32 %v781, %v621
  %v807 = vmul.f32 %v782, %v631
  %v808 = vmul.f32 %v783, %v641
  %v809 = vmul.f32 %v784, %v651
  %v810 = vmul.f32 %v785, %v661
  %v811 = vmul.f32 %v786, %v671
  %v812 = vmul.f32 %v787, %v681
  %v813 = vmul.f32 %v788, %v691
  %v814 = vmul.f32 %v789, %v701
  %v815 = vmul.f32 %v790, %v711
  %v816 = vmul.f32 %v791, %v721
  %v817 = vmul.f32 %v792, %v731
  %v818 = vmul.f32 %v793, %v741
  %v819 = vmul.f32 %v794, %v751
  %v820 = vmul.f32 %v795, %v761
  %v821 = vmul.f32 %v796, %v771
  %v822 = vld [vmem:[%s2 + $0x1] sm:$0x1]
  %v823 = vperm.slane %v822, 0
  %v824 = vmul.f32 %v797, %v823
  %v825 = vmul.f32 %v798, %v823
  %v826 = vmul.f32 %v799, %v823
  %v827 = vmul.f32 %v800, %v823
  %v828 = vmul.f32 %v801, %v823
  %v829 = vmul.f32 %v802, %v823
  %v830 = vmul.f32 %v803, %v823
  %v831 = vmul.f32 %v804, %v823
  %v832 = vmul.f32 %v805, %v823
  %v833 = vmul.f32 %v806, %v823
  %v834 = vmul.f32 %v807, %v823
  %v835 = vmul.f32 %v808, %v823
  %v836 = vmul.f32 %v809, %v823
  %v837 = vmul.f32 %v810, %v823
  %v838 = vmul.f32 %v811, %v823
  %v839 = vmul.f32 %v812, %v823
  %v840 = vmul.f32 %v813, %v823
  %v841 = vmul.f32 %v814, %v823
  %v842 = vmul.f32 %v815, %v823
  %v843 = vmul.f32 %v816, %v823
  %v844 = vmul.f32 %v817, %v823
  %v845 = vmul.f32 %v818, %v823
  %v846 = vmul.f32 %v819, %v823
  %v847 = vmul.f32 %v820, %v823
  %v848 = vmul.f32 %v821, %v823
  %v849 = vld [vmem:[%s2 + $0x2] sm:$0x1]
  %v850 = vperm.slane %v849, 0
  %v851 = vadd.f32 %v824, %v850
  %v852 = vadd.f32 %v825, %v850
  %v853 = vadd.f32 %v826, %v850
  %v854 = vadd.f32 %v827, %v850
  %v855 = vadd.f32 %v828, %v850
  %v856 = vadd.f32 %v829, %v850
  %v857 = vadd.f32 %v830, %v850
  %v858 = vadd.f32 %v831, %v850
  %v859 = vadd.f32 %v832, %v850
  %v860 = vadd.f32 %v833, %v850
  %v861 = vadd.f32 %v834, %v850
  %v862 = vadd.f32 %v835, %v850
  %v863 = vadd.f32 %v836, %v850
  %v864 = vadd.f32 %v837, %v850
  %v865 = vadd.f32 %v838, %v850
  %v866 = vadd.f32 %v839, %v850
  %v867 = vadd.f32 %v840, %v850
  %v868 = vadd.f32 %v841, %v850
  %v869 = vadd.f32 %v842, %v850
  %v870 = vadd.f32 %v843, %v850
  %v871 = vadd.f32 %v844, %v850
  %v872 = vadd.f32 %v845, %v850
  %v873 = vadd.f32 %v846, %v850
  %v874 = vadd.f32 %v847, %v850
  %v875 = vadd.f32 %v848, %v850
  %v876 = vtanh.pop %v851
  %v877 = vtanh.pop %v852
  %v878 = vtanh.pop %v853
  %v879 = vtanh.pop %v854
  %v880 = vtanh.pop %v855
  %v881 = vtanh.pop %v856
  %v882 = vtanh.pop %v857
  %v883 = vtanh.pop %v858
  %v884 = vtanh.pop %v859
  %v885 = vtanh.pop %v860
  %v886 = vtanh.pop %v861
  %v887 = vtanh.pop %v862
  %v888 = vtanh.pop %v863
  %v889 = vtanh.pop %v864
  %v890 = vtanh.pop %v865
  %v891 = vtanh.pop %v866
  %v892 = vtanh.pop %v867
  %v893 = vtanh.pop %v868
  %v894 = vtanh.pop %v869
  %v895 = vtanh.pop %v870
  %v896 = vtanh.pop %v871
  %v897 = vtanh.pop %v872
  %v898 = vtanh.pop %v873
  %v899 = vtanh.pop %v874
  %v900 = vtanh.pop %v875
  %v901 = vpack.c.bf16 %v877, %v876
  %v902 = vpack.c.bf16 %v879, %v878
  %v903 = vpack.c.bf16 %v881, %v880
  %v904 = vpack.c.bf16 %v883, %v882
  %v905 = vpack.c.bf16 %v885, %v884
  %v906 = vpack.c.bf16 %v887, %v886
  %v907 = vpack.c.bf16 %v889, %v888
  %v908 = vpack.c.bf16 %v891, %v890
  %v909 = vpack.c.bf16 %v893, %v892
  %v910 = vpack.c.bf16 %v895, %v894
  %v911 = vpack.c.bf16 %v897, %v896
  %v912 = vpack.c.bf16 %v899, %v898
  %v913 = vpack.c.bf16 %v900, %v900
  %v914 = vld [vmem:[%s3] sm:$0xf]
  %v915 = vld [vmem:[%s3 + $0x4] sm:$0xf]
  %v916 = vld [vmem:[%s3 + $0x8] sm:$0xf]
  %v917 = vld [vmem:[%s3 + $0xc] sm:$0xf]
  %v918 = vld [vmem:[%s3 + $0x10] sm:$0xf]
  %v919 = vld [vmem:[%s3 + $0x14] sm:$0xf]
  %v920 = vld [vmem:[%s3 + $0x18] sm:$0xf]
  %v921 = vld [vmem:[%s3 + $0x1c] sm:$0xf]
  %v922 = vld [vmem:[%s4] sm:$0x1]
  %v924 = vperm.slane %v922, 0
  %v934 = vunpack.c.l.b16 %v914
  %v935 = vunpack.c.l.b16 %v915
  %v936 = vunpack.c.l.b16 %v916
  %v937 = vunpack.c.l.b16 %v917
  %v938 = vunpack.c.l.b16 %v918
  %v939 = vunpack.c.l.b16 %v919
  %v940 = vunpack.c.l.b16 %v920
  %v941 = vunpack.c.l.b16 %v921
  %v942 = vpack.c.b16 %v935, %v934
  %v943 = vpack.c.b16 %v937, %v936
  %v944 = vpack.c.b16 %v939, %v938
  %v945 = vpack.c.b16 %v941, %v940
  %v951 = vsel %vm196, %v901, 0
  %v954 = vsel %vm196, %v902, 0
  %v957 = vsel %vm196, %v903, 0
  %v960 = vsel %vm196, %v904, 0
  %v963 = vsel %vm196, %v905, 0
  %v966 = vsel %vm196, %v906, 0
  %v969 = vsel %vm196, %v907, 0
  %v972 = vsel %vm196, %v908, 0
  %v975 = vsel %vm196, %v909, 0
  %v978 = vsel %vm196, %v910, 0
  %v981 = vsel %vm196, %v911, 0
  %v984 = vsel %vm196, %v912, 0
  %v987 = vsel %vm196, %v913, 0
  %989 = vmatpush.bf16.msra.mxu0 0
  %990 = vmatpush.bf16.msra.mxu0 0
  %991 = vmatpush.bf16.msra.mxu0 0
  %992 = vmatpush.bf16.msra.mxu0 0
  %993 = vmatpush.bf16.msra.mxu0 %v945
  %994 = vmatpush.bf16.msra.mxu0 %v944
  %995 = vmatpush.bf16.msra.mxu0 %v943
  %996 = vmatpush.bf16.msra.mxu0 %v942
  %997 = vmatmul.bf16.gmra.mxu0 %v951
  %v998 = vpop.f32.mrf.mxu0
  %v999 = vadd.f32 %v924, %v998
  %v1000 = vpop.f32.mrf.mxu0
  %v1001 = vadd.f32 %v924, %v1000
  %1002 = vmatmul.bf16.gmra.mxu0 %v954
  %v1003 = vpop.f32.mrf.mxu0
  %v1004 = vadd.f32 %v924, %v1003
  %v1005 = vpop.f32.mrf.mxu0
  %v1006 = vadd.f32 %v924, %v1005
  %1007 = vmatmul.bf16.gmra.mxu0 %v957
  %v1008 = vpop.f32.mrf.mxu0
  %v1009 = vadd.f32 %v924, %v1008
  %v1010 = vpop.f32.mrf.mxu0
  %v1011 = vadd.f32 %v924, %v1010
  %1012 = vmatmul.bf16.gmra.mxu0 %v960
  %v1013 = vpop.f32.mrf.mxu0
  %v1014 = vadd.f32 %v924, %v1013
  %v1015 = vpop.f32.mrf.mxu0
  %v1016 = vadd.f32 %v924, %v1015
  %1017 = vmatmul.bf16.gmra.mxu0 %v963
  %v1018 = vpop.f32.mrf.mxu0
  %v1019 = vadd.f32 %v924, %v1018
  %v1020 = vpop.f32.mrf.mxu0
  %v1021 = vadd.f32 %v924, %v1020
  %1022 = vmatmul.bf16.gmra.mxu0 %v966
  %v1023 = vpop.f32.mrf.mxu0
  %v1024 = vadd.f32 %v924, %v1023
  %v1025 = vpop.f32.mrf.mxu0
  %v1026 = vadd.f32 %v924, %v1025
  %1027 = vmatmul.bf16.gmra.mxu0 %v969
  %v1028 = vpop.f32.mrf.mxu0
  %v1029 = vadd.f32 %v924, %v1028
  %v1030 = vpop.f32.mrf.mxu0
  %v1031 = vadd.f32 %v924, %v1030
  %1032 = vmatmul.bf16.gmra.mxu0 %v972
  %v1033 = vpop.f32.mrf.mxu0
  %v1034 = vadd.f32 %v924, %v1033
  %v1035 = vpop.f32.mrf.mxu0
  %v1036 = vadd.f32 %v924, %v1035
  %1037 = vmatmul.bf16.gmra.mxu0 %v975
  %v1038 = vpop.f32.mrf.mxu0
  %v1039 = vadd.f32 %v924, %v1038
  %v1040 = vpop.f32.mrf.mxu0
  %v1041 = vadd.f32 %v924, %v1040
  %1042 = vmatmul.bf16.gmra.mxu0 %v978
  %v1043 = vpop.f32.mrf.mxu0
  %v1044 = vadd.f32 %v924, %v1043
  %v1045 = vpop.f32.mrf.mxu0
  %v1046 = vadd.f32 %v924, %v1045
  %1047 = vmatmul.bf16.gmra.mxu0 %v981
  %v1048 = vpop.f32.mrf.mxu0
  %v1049 = vadd.f32 %v924, %v1048
  %v1050 = vpop.f32.mrf.mxu0
  %v1051 = vadd.f32 %v924, %v1050
  %1052 = vmatmul.bf16.gmra.mxu0 %v984
  %v1053 = vpop.f32.mrf.mxu0
  %v1054 = vadd.f32 %v924, %v1053
  %v1055 = vpop.f32.mrf.mxu0
  %v1056 = vadd.f32 %v924, %v1055
  %1057 = vmatmul.bf16.gmra.mxu0 %v987
  %v1058 = vpop.f32.mrf.mxu0
  %v1059 = vadd.f32 %v924, %v1058
  %v1060 = vpop.f32.mrf.mxu0
  %1061 = vdwg.mxu0
  %v1062 = vmax.f32 %v999, 0.0
  %v1063 = vmax.f32 %v1001, 0.0
  %v1064 = vmax.f32 %v1004, 0.0
  %v1065 = vmax.f32 %v1006, 0.0
  %v1066 = vmax.f32 %v1009, 0.0
  %v1067 = vmax.f32 %v1011, 0.0
  %v1068 = vmax.f32 %v1014, 0.0
  %v1069 = vmax.f32 %v1016, 0.0
  %v1070 = vmax.f32 %v1019, 0.0
  %v1071 = vmax.f32 %v1021, 0.0
  %v1072 = vmax.f32 %v1024, 0.0
  %v1073 = vmax.f32 %v1026, 0.0
  %v1074 = vmax.f32 %v1029, 0.0
  %v1075 = vmax.f32 %v1031, 0.0
  %v1076 = vmax.f32 %v1034, 0.0
  %v1077 = vmax.f32 %v1036, 0.0
  %v1078 = vmax.f32 %v1039, 0.0
  %v1079 = vmax.f32 %v1041, 0.0
  %v1080 = vmax.f32 %v1044, 0.0
  %v1081 = vmax.f32 %v1046, 0.0
  %v1082 = vmax.f32 %v1049, 0.0
  %v1083 = vmax.f32 %v1051, 0.0
  %v1084 = vmax.f32 %v1054, 0.0
  %v1085 = vmax.f32 %v1056, 0.0
  %v1086 = vmax.f32 %v1059, 0.0
  %v1087 = vpack.c.bf16 %v1063, %v1062
  %v1088 = vpack.c.bf16 %v1065, %v1064
  %v1089 = vpack.c.bf16 %v1067, %v1066
  %v1090 = vpack.c.bf16 %v1069, %v1068
  %v1091 = vpack.c.bf16 %v1071, %v1070
  %v1092 = vpack.c.bf16 %v1073, %v1072
  %v1093 = vpack.c.bf16 %v1075, %v1074
  %v1094 = vpack.c.bf16 %v1077, %v1076
  %v1095 = vpack.c.bf16 %v1079, %v1078
  %v1096 = vpack.c.bf16 %v1081, %v1080
  %v1097 = vpack.c.bf16 %v1083, %v1082
  %v1098 = vpack.c.bf16 %v1085, %v1084
  %v1099 = vpack.c.bf16 %v1086, %v1086
  %v1100 = vld [vmem:[%s5] sm:$0xf]
  %v1101 = vld [vmem:[%s5 + $0x4] sm:$0xf]
  %v1102 = vld [vmem:[%s5 + $0x8] sm:$0xf]
  %v1103 = vld [vmem:[%s5 + $0xc] sm:$0xf]
  %v1104 = vld [vmem:[%s5 + $0x10] sm:$0xf]
  %v1105 = vld [vmem:[%s5 + $0x14] sm:$0xf]
  %v1106 = vld [vmem:[%s5 + $0x18] sm:$0xf]
  %v1107 = vld [vmem:[%s5 + $0x1c] sm:$0xf]
  %v1108 = vld [vmem:[%s5 + $0x20] sm:$0xf]
  %v1109 = vld [vmem:[%s5 + $0x24] sm:$0xf]
  %v1110 = vld [vmem:[%s5 + $0x28] sm:$0xf]
  %v1111 = vld [vmem:[%s5 + $0x2c] sm:$0xf]
  %v1112 = vld [vmem:[%s5 + $0x30] sm:$0xf]
  %v1113 = vld [vmem:[%s5 + $0x34] sm:$0xf]
  %v1114 = vld [vmem:[%s5 + $0x38] sm:$0xf]
  %v1115 = vld [vmem:[%s5 + $0x3c] sm:$0xf]
  %v1116 = vld [vmem:[%s6] sm:$0x1]
  %v1118 = vperm.slane %v1116, 0
  %v1136 = vunpack.c.l.b16 %v1100
  %v1137 = vunpack.c.l.b16 %v1101
  %v1138 = vunpack.c.l.b16 %v1102
  %v1139 = vunpack.c.l.b16 %v1103
  %v1140 = vunpack.c.l.b16 %v1104
  %v1141 = vunpack.c.l.b16 %v1105
  %v1142 = vunpack.c.l.b16 %v1106
  %v1143 = vunpack.c.l.b16 %v1107
  %v1144 = vunpack.c.l.b16 %v1108
  %v1145 = vunpack.c.l.b16 %v1109
  %v1146 = vunpack.c.l.b16 %v1110
  %v1147 = vunpack.c.l.b16 %v1111
  %v1148 = vunpack.c.l.b16 %v1112
  %v1149 = vunpack.c.l.b16 %v1113
  %v1150 = vunpack.c.l.b16 %v1114
  %v1151 = vunpack.c.l.b16 %v1115
  %v1152 = vpack.c.b16 %v1137, %v1136
  %v1153 = vpack.c.b16 %v1139, %v1138
  %v1154 = vpack.c.b16 %v1141, %v1140
  %v1155 = vpack.c.b16 %v1143, %v1142
  %v1156 = vpack.c.b16 %v1145, %v1144
  %v1157 = vpack.c.b16 %v1147, %v1146
  %v1158 = vpack.c.b16 %v1149, %v1148
  %v1159 = vpack.c.b16 %v1151, %v1150
  %1168 = vmatpush.bf16.msra.mxu0 %v1159
  %1169 = vmatpush.bf16.msra.mxu0 %v1158
  %1170 = vmatpush.bf16.msra.mxu0 %v1157
  %1171 = vmatpush.bf16.msra.mxu0 %v1156
  %1172 = vmatpush.bf16.msra.mxu0 %v1155
  %1173 = vmatpush.bf16.msra.mxu0 %v1154
  %1174 = vmatpush.bf16.msra.mxu0 %v1153
  %1175 = vmatpush.bf16.msra.mxu0 %v1152
  %1176 = vmatmul.bf16.gmra.mxu0 %v1087
  %v1177 = vpop.f32.mrf.mxu0
  %v1178 = vadd.f32 %v1118, %v1177
  %v1179 = vpop.f32.mrf.mxu0
  %v1180 = vadd.f32 %v1118, %v1179
  %1181 = vmatmul.bf16.gmra.mxu0 %v1088
  %v1182 = vpop.f32.mrf.mxu0
  %v1183 = vadd.f32 %v1118, %v1182
  %v1184 = vpop.f32.mrf.mxu0
  %v1185 = vadd.f32 %v1118, %v1184
  %1186 = vmatmul.bf16.gmra.mxu0 %v1089
  %v1187 = vpop.f32.mrf.mxu0
  %v1188 = vadd.f32 %v1118, %v1187
  %v1189 = vpop.f32.mrf.mxu0
  %v1190 = vadd.f32 %v1118, %v1189
  %1191 = vmatmul.bf16.gmra.mxu0 %v1090
  %v1192 = vpop.f32.mrf.mxu0
  %v1193 = vadd.f32 %v1118, %v1192
  %v1194 = vpop.f32.mrf.mxu0
  %v1195 = vadd.f32 %v1118, %v1194
  %1196 = vmatmul.bf16.gmra.mxu0 %v1091
  %v1197 = vpop.f32.mrf.mxu0
  %v1198 = vadd.f32 %v1118, %v1197
  %v1199 = vpop.f32.mrf.mxu0
  %v1200 = vadd.f32 %v1118, %v1199
  %1201 = vmatmul.bf16.gmra.mxu0 %v1092
  %v1202 = vpop.f32.mrf.mxu0
  %v1203 = vadd.f32 %v1118, %v1202
  %v1204 = vpop.f32.mrf.mxu0
  %v1205 = vadd.f32 %v1118, %v1204
  %1206 = vmatmul.bf16.gmra.mxu0 %v1093
  %v1207 = vpop.f32.mrf.mxu0
  %v1208 = vadd.f32 %v1118, %v1207
  %v1209 = vpop.f32.mrf.mxu0
  %v1210 = vadd.f32 %v1118, %v1209
  %1211 = vmatmul.bf16.gmra.mxu0 %v1094
  %v1212 = vpop.f32.mrf.mxu0
  %v1213 = vadd.f32 %v1118, %v1212
  %v1214 = vpop.f32.mrf.mxu0
  %v1215 = vadd.f32 %v1118, %v1214
  %1216 = vmatmul.bf16.gmra.mxu0 %v1095
  %v1217 = vpop.f32.mrf.mxu0
  %v1218 = vadd.f32 %v1118, %v1217
  %v1219 = vpop.f32.mrf.mxu0
  %v1220 = vadd.f32 %v1118, %v1219
  %1221 = vmatmul.bf16.gmra.mxu0 %v1096
  %v1222 = vpop.f32.mrf.mxu0
  %v1223 = vadd.f32 %v1118, %v1222
  %v1224 = vpop.f32.mrf.mxu0
  %v1225 = vadd.f32 %v1118, %v1224
  %1226 = vmatmul.bf16.gmra.mxu0 %v1097
  %v1227 = vpop.f32.mrf.mxu0
  %v1228 = vadd.f32 %v1118, %v1227
  %v1229 = vpop.f32.mrf.mxu0
  %v1230 = vadd.f32 %v1118, %v1229
  %1231 = vmatmul.bf16.gmra.mxu0 %v1098
  %v1232 = vpop.f32.mrf.mxu0
  %v1233 = vadd.f32 %v1118, %v1232
  %v1234 = vpop.f32.mrf.mxu0
  %v1235 = vadd.f32 %v1118, %v1234
  %1236 = vmatmul.bf16.gmra.mxu0 %v1099
  %v1237 = vpop.f32.mrf.mxu0
  %v1238 = vadd.f32 %v1118, %v1237
  %v1239 = vpop.f32.mrf.mxu0
  %1240 = vdwg.mxu0
  %1241 = vst [vmem:[%s7] sm:$0xff] %v1178
  %1242 = vst [vmem:[%s7 + $0x8] sm:$0xff] %v1180
  %1243 = vst [vmem:[%s7 + $0x10] sm:$0xff] %v1183
  %1244 = vst [vmem:[%s7 + $0x18] sm:$0xff] %v1185
  %1245 = vst [vmem:[%s7 + $0x20] sm:$0xff] %v1188
  %1246 = vst [vmem:[%s7 + $0x28] sm:$0xff] %v1190
  %1247 = vst [vmem:[%s7 + $0x30] sm:$0xff] %v1193
  %1248 = vst [vmem:[%s7 + $0x38] sm:$0xff] %v1195
  %1249 = vst [vmem:[%s7 + $0x40] sm:$0xff] %v1198
  %1250 = vst [vmem:[%s7 + $0x48] sm:$0xff] %v1200
  %1251 = vst [vmem:[%s7 + $0x50] sm:$0xff] %v1203
  %1252 = vst [vmem:[%s7 + $0x58] sm:$0xff] %v1205
  %1253 = vst [vmem:[%s7 + $0x60] sm:$0xff] %v1208
  %1254 = vst [vmem:[%s7 + $0x68] sm:$0xff] %v1210
  %1255 = vst [vmem:[%s7 + $0x70] sm:$0xff] %v1213
  %1256 = vst [vmem:[%s7 + $0x78] sm:$0xff] %v1215
  %1257 = vst [vmem:[%s7 + $0x80] sm:$0xff] %v1218
  %1258 = vst [vmem:[%s7 + $0x88] sm:$0xff] %v1220
  %1259 = vst [vmem:[%s7 + $0x90] sm:$0xff] %v1223
  %1260 = vst [vmem:[%s7 + $0x98] sm:$0xff] %v1225
  %1261 = vst [vmem:[%s7 + $0xa0] sm:$0xff] %v1228
  %1262 = vst [vmem:[%s7 + $0xa8] sm:$0xff] %v1230
  %1263 = vst [vmem:[%s7 + $0xb0] sm:$0xff] %v1233
  %1264 = vst [vmem:[%s7 + $0xb8] sm:$0xff] %v1235
  %1265 = vst [vmem:[%s7 + $0xc0] sm:$0xff] %v1238
  // Predicated region
  $region30: #{_lambda_.1} parent=0 // pred_check
    _
  $region31: #{_lambda_.1} parent=0 // pred_check_branch
    %1267 = sbr.rel (0) target = $region33
  $region32: #{_lambda_.1} parent=0 // pred_region
    _
  $region33: #{_lambda_.1} parent=0 // pred_fallthru
    _
  // Predicated region
  $region34: #{_lambda_.1} parent=0 // pred_check
    _
  $region35: #{_lambda_.1} parent=0 // pred_check_branch
    %1269 = sbr.rel (0) target = $region37
  $region36: #{_lambda_.1} parent=0 // pred_region
    _
  $region37: #{_lambda_.1} parent=0 // pred_fallthru
    _

</llo_original>
